<compile_context>
chip_gen: v7x
topology: tpu7x:2x2x1
jax: 0.10.0
libtpu: 0.0.40
codegen_flags: <defaults>
</compile_context>

<pallas_src>
import functools

import jax
import jax.numpy as jnp
import numpy as np
from jax import lax
from jax.experimental import pallas as pl
from jax.experimental.pallas import tpu as pltpu

_LANE = 128   # lane width (last vreg dim)
_SUB = 8      # sublane width (second-to-last vreg dim)


def _round_up(a: int, m: int) -> int:
    return (a + m - 1) // m * m


def _dsconv1d_kernel(xa_ref, xh_ref, wd_ref, bd_ref, wp_ref, bp_ref, out_ref, *,
                     k: int, tl: int):
    """One (batch, L-tile) grid step.

    xa_ref: (1, TL, Cp)    main input rows [j*TL, j*TL+TL)           (input dtype)
    xh_ref: (1, HALO, Cp)  halo input rows [j*TL+TL, j*TL+TL+HALO)   (input dtype)
    wd_ref: (k, Cp)   f32  depthwise taps (channels on lanes)
    bd_ref: (1, Cp)   f32  depthwise bias
    wp_ref: (Cp, Co)       pointwise weight (input dtype)
    bp_ref: (1, Co)   f32  pointwise bias
    out_ref: (1, TL, Co)
    """
    # (TL + HALO, Cp) window; both pieces are 8-row aligned so the concat is cheap.
    xw = jnp.concatenate([xa_ref[0], xh_ref[0]], axis=0)

    # Depthwise conv: k statically shifted tile-local windows, accumulated in f32
    # via the multiply with the f32 taps (no full-window f32 materialization).
    # NOTE: these are sublane shifts of already VMEM-resident data; if profiling
    # shows vld/VALU saturation they can be moved onto the XLU with pltpu.roll.
    acc = xw[0:tl, :] * wd_ref[0:1, :]
    for t in range(1, k):
        acc = acc + xw[t:t + tl, :] * wd_ref[t:t + 1, :]
    y = acc + bd_ref[0:1, :]                                 # (TL, Cp), f32

    # Pointwise 1x1 conv == lane-dense matmul on the MXU; operands stay in the
    # parameter dtype, accumulation in f32.
    out = jnp.dot(y.astype(wp_ref.dtype), wp_ref[...],
                  preferred_element_type=jnp.float32)        # (TL, Co)
    out_ref[0] = (out + bp_ref[0:1, :]).astype(out_ref.dtype)


def depthwise_separable_conv1d(x, wd, bd, wp, bp, *, k: int, l_tile: int = 512):
    """Depthwise separable Conv1d matching the PyTorch module (dim=1).

    x:  (B, Cin, L) NCL.  wd: (Cin, 1, k) depthwise weight (groups=Cin).  bd: (Cin,).
    wp: (Cout, Cin, 1) pointwise weight.  bp: (Cout,).
    Returns (B, Cout, Lout) with Lout = L + 2*(k//2) - k + 1 (padding=k//2).
    """
    B, Cin, L = x.shape
    Cout = wp.shape[0]
    pad = k // 2
    Lout = L + 2 * pad - k + 1

    # Lane-dense channel padding (MXU K/N dims, unmasked output stores).
    cp = _round_up(Cin, _LANE)
    co = _round_up(Cout, _LANE)
    # Sublane-aligned halo covering the k-1 extra rows of the depthwise taps.
    halo = _round_up(max(k - 1, 1), _SUB)
    # L tile: multiple of the halo (so the halo block index is exact), mult of 8.
    tl = _round_up(min(l_tile, _round_up(Lout, _SUB)), halo)
    n_lt = pl.cdiv(Lout, tl)
    l_tot = n_lt * tl + halo

    # ---- layout plumbing (plain JAX) ---------------------------------------
    # NCL -> zero-padded, channel-padded channels-last slab (B, l_tot, cp).
    # TODO(synk): consume NCL directly (or allow_input_fusion) in production to
    # avoid this extra HBM pass over the activations.
    x_nlc = jnp.transpose(x, (0, 2, 1))                                  # (B, L, Cin)
    xpad = jnp.zeros((B, l_tot, cp), x.dtype).at[:, pad:pad + L, :Cin].set(x_nlc)

    wd_kc = jnp.zeros((k, cp), jnp.float32).at[:, :Cin].set(
        jnp.transpose(wd[:, 0, :], (1, 0)).astype(jnp.float32))          # (k, cp)
    bd_2d = jnp.zeros((1, cp), jnp.float32).at[:, :Cin].set(
        bd.astype(jnp.float32)[None, :])
    wp_ck = jnp.zeros((cp, co), x.dtype).at[:Cin, :Cout].set(
        jnp.transpose(wp[:, :, 0], (1, 0)).astype(x.dtype))              # (cp, co)
    bp_2d = jnp.zeros((1, co), jnp.float32).at[:, :Cout].set(
        bp.astype(jnp.float32)[None, :])

    kernel = functools.partial(_dsconv1d_kernel, k=k, tl=tl)

    flops = 2 * B * Lout * Cin * Cout + 2 * B * Lout * Cin * k
    bytes_accessed = int(
        xpad.size * xpad.dtype.itemsize
        + B * n_lt * tl * co * xpad.dtype.itemsize
        + wd_kc.size * 4 + wp_ck.size * wp_ck.dtype.itemsize)

    out_pad = pl.pallas_call(
        kernel,
        out_shape=jax.ShapeDtypeStruct((B, n_lt * tl, co), x.dtype),
        grid=(B, n_lt),
        in_specs=[
            # main L tile
            pl.BlockSpec((1, tl, cp), lambda b, j: (b, j, 0)),
            # halo: the `halo` rows immediately after the main tile
            pl.BlockSpec((1, halo, cp),
                         lambda b, j: (b, (j + 1) * (tl // halo), 0)),
            pl.BlockSpec((k, cp), lambda b, j: (0, 0)),
            pl.BlockSpec((1, cp), lambda b, j: (0, 0)),
            pl.BlockSpec((cp, co), lambda b, j: (0, 0)),
            pl.BlockSpec((1, co), lambda b, j: (0, 0)),
        ],
        out_specs=pl.BlockSpec((1, tl, co), lambda b, j: (b, j, 0)),
        compiler_params=pltpu.CompilerParams(
            # Independent output tiles on both axes -> megacore / both v7x TCs.
            dimension_semantics=("parallel", "parallel"),
            # Per-step footprint is bounded by the L tile; well under v7x's 64 MiB.
            vmem_limit_bytes=32 * 1024 * 1024,
        ),
        cost_estimate=pl.CostEstimate(
            flops=flops, transcendentals=0, bytes_accessed=bytes_accessed),
    )(xpad, xpad, wd_kc, bd_2d, wp_ck, bp_2d)

    out_nlc = out_pad[:, :Lout, :Cout]                 # drop L / channel padding
    return jnp.transpose(out_nlc, (0, 2, 1))           # NLC -> NCL


def _reference(x, wd, bd, wp, bp, *, k):
    """Pure-JAX reference matching PyTorch Conv1d semantics."""
    pad = k // 2
    dn = ("NCH", "OIH", "NCH")
    y = lax.conv_general_dilated(x, wd, window_strides=(1,), padding=[(pad, pad)],
                                 dimension_numbers=dn,
                                 feature_group_count=x.shape[1])
    y = y + bd[None, :, None]
    z = lax.conv_general_dilated(y, wp, window_strides=(1,), padding=[(0, 0)],
                                 dimension_numbers=dn)
    return z + bp[None, :, None]


if __name__ == "__main__":
    B, Cin, Cout, L, K = 2, 4, 8, 16, 3

    key = jax.random.PRNGKey(0)
    kx, kwd, kwp = jax.random.split(key, 3)

    x = jax.random.normal(kx, (B, Cin, L), dtype=jnp.float32)

    # Deterministic parameter init (shapes from the PyTorch module's __init__):
    # depthwise weight (in_ch, 1, k): kaiming_normal_ -> std = sqrt(2 / k); bias 0.
    wd = jax.random.normal(kwd, (Cin, 1, K), dtype=jnp.float32) * jnp.sqrt(2.0 / K)
    bd = jnp.zeros((Cin,), dtype=jnp.float32)
    # pointwise weight (out_ch, in_ch, 1); bias 0.
    wp = jax.random.normal(kwp, (Cout, Cin, 1), dtype=jnp.float32) * jnp.sqrt(2.0 / Cin)
    bp = jnp.zeros((Cout,), dtype=jnp.float32)

    out = depthwise_separable_conv1d(x, wd, bd, wp, bp, k=K)
    out = jax.block_until_ready(out)

    ref = _reference(x, wd, bd, wp, bp, k=K)
    np.testing.assert_allclose(np.asarray(out), np.asarray(ref), rtol=1e-5, atol=1e-5)

    print("KERNEL_OK")
</pallas_src>

<mosaic_0001>
module attributes {stable_mosaic.version = 11 : i64} {
  func.func @_dsconv1d_kernel(%arg0: i32, %arg1: i32, %arg2: memref<1x16x128xf32, #tpu.memory_space<vmem>>, %arg3: memref<1x8x128xf32, #tpu.memory_space<vmem>>, %arg4: memref<3x128xf32, #tpu.memory_space<vmem>>, %arg5: memref<1x128xf32, #tpu.memory_space<vmem>>, %arg6: memref<128x128xf32, #tpu.memory_space<vmem>>, %arg7: memref<1x128xf32, #tpu.memory_space<vmem>>, %arg8: memref<1x16x128xf32, #tpu.memory_space<vmem>>) attributes {dimension_semantics = [#tpu.dimension_semantics<parallel>, #tpu.dimension_semantics<parallel>], iteration_bounds = array<i64: 2, 1>, scalar_prefetch = 0 : i64, scratch_operands = 0 : i64, tpu.core_type = #tpu.core_type<tc>, window_params = [{transform_indices = @transform_0, window_bounds = array<i64: 1, 16, 128>}, {transform_indices = @transform_1, window_bounds = array<i64: 1, 8, 128>}, {pipeline_mode = #tpu.pipeline_mode<synchronous>, transform_indices = @transform_2, window_bounds = array<i64: 3, 128>}, {pipeline_mode = #tpu.pipeline_mode<synchronous>, transform_indices = @transform_3, window_bounds = array<i64: 1, 128>}, {pipeline_mode = #tpu.pipeline_mode<synchronous>, transform_indices = @transform_4, window_bounds = array<i64: 128, 128>}, {pipeline_mode = #tpu.pipeline_mode<synchronous>, transform_indices = @transform_5, window_bounds = array<i64: 1, 128>}, {transform_indices = @transform_6, window_bounds = array<i64: 1, 16, 128>}]} {
    %c0 = arith.constant 0 : index
    %c0_0 = arith.constant 0 : index
    %c0_1 = arith.constant 0 : index
    %0 = vector.load %arg2[%c0, %c0_0, %c0_1] : memref<1x16x128xf32, #tpu.memory_space<vmem>>, vector<1x16x128xf32>
    %1 = vector.shape_cast %0 : vector<1x16x128xf32> to vector<16x128xf32>
    %c0_2 = arith.constant 0 : index
    %c0_3 = arith.constant 0 : index
    %c0_4 = arith.constant 0 : index
    %2 = vector.load %arg3[%c0_2, %c0_3, %c0_4] : memref<1x8x128xf32, #tpu.memory_space<vmem>>, vector<1x8x128xf32>
    %3 = vector.shape_cast %2 : vector<1x8x128xf32> to vector<8x128xf32>
    %4 = tpu.concatenate %1, %3 in 0 : vector<16x128xf32>, vector<8x128xf32> -> vector<24x128xf32>
    %5 = vector.extract_strided_slice %4 {offsets = [0, 0], sizes = [16, 128], strides = [1, 1]} : vector<24x128xf32> to vector<16x128xf32>
    %c0_5 = arith.constant 0 : index
    %c0_6 = arith.constant 0 : index
    %6 = vector.load %arg4[%c0_5, %c0_6] : memref<3x128xf32, #tpu.memory_space<vmem>>, vector<1x128xf32>
    %7 = vector.broadcast %6 : vector<1x128xf32> to vector<16x128xf32>
    %8 = arith.mulf %5, %7 : vector<16x128xf32>
    %9 = vector.extract_strided_slice %4 {offsets = [1, 0], sizes = [16, 128], strides = [1, 1]} : vector<24x128xf32> to vector<16x128xf32>
    %c1 = arith.constant 1 : index
    %c0_7 = arith.constant 0 : index
    %10 = vector.load %arg4[%c1, %c0_7] : memref<3x128xf32, #tpu.memory_space<vmem>>, vector<1x128xf32>
    %11 = vector.broadcast %10 : vector<1x128xf32> to vector<16x128xf32>
    %12 = arith.mulf %9, %11 : vector<16x128xf32>
    %13 = arith.addf %8, %12 : vector<16x128xf32>
    %14 = vector.extract_strided_slice %4 {offsets = [2, 0], sizes = [16, 128], strides = [1, 1]} : vector<24x128xf32> to vector<16x128xf32>
    %c2 = arith.constant 2 : index
    %c0_8 = arith.constant 0 : index
    %15 = vector.load %arg4[%c2, %c0_8] : memref<3x128xf32, #tpu.memory_space<vmem>>, vector<1x128xf32>
    %16 = vector.broadcast %15 : vector<1x128xf32> to vector<16x128xf32>
    %17 = arith.mulf %14, %16 : vector<16x128xf32>
    %18 = arith.addf %13, %17 : vector<16x128xf32>
    %c0_9 = arith.constant 0 : index
    %c0_10 = arith.constant 0 : index
    %19 = vector.load %arg5[%c0_9, %c0_10] : memref<1x128xf32, #tpu.memory_space<vmem>>, vector<1x128xf32>
    %20 = vector.broadcast %19 : vector<1x128xf32> to vector<16x128xf32>
    %21 = arith.addf %18, %20 : vector<16x128xf32>
    %c0_11 = arith.constant 0 : index
    %c0_12 = arith.constant 0 : index
    %22 = vector.load %arg6[%c0_11, %c0_12] : memref<128x128xf32, #tpu.memory_space<vmem>>, vector<128x128xf32>
    %cst = arith.constant dense<0.000000e+00> : vector<16x128xf32>
    %23 = tpu.matmul %21, %22, %cst {dimension_numbers = #tpu.dot_dimension_numbers<[1], [0], [0], [1], [0, 0, 1, 1], [], []>} : vector<16x128xf32>, vector<128x128xf32>, vector<16x128xf32> -> vector<16x128xf32>
    %c0_13 = arith.constant 0 : index
    %c0_14 = arith.constant 0 : index
    %24 = vector.load %arg7[%c0_13, %c0_14] : memref<1x128xf32, #tpu.memory_space<vmem>>, vector<1x128xf32>
    %25 = vector.broadcast %24 : vector<1x128xf32> to vector<16x128xf32>
    %26 = arith.addf %23, %25 : vector<16x128xf32>
    %c0_15 = arith.constant 0 : index
    %c0_16 = arith.constant 0 : index
    %c0_17 = arith.constant 0 : index
    %27 = vector.load %arg8[%c0_15, %c0_16, %c0_17] : memref<1x16x128xf32, #tpu.memory_space<vmem>>, vector<1x16x128xf32>
    %28 = vector.shape_cast %27 : vector<1x16x128xf32> to vector<16x128xf32>
    %29 = vector.shape_cast %26 : vector<16x128xf32> to vector<1x16x128xf32>
    tpu.vector_store %arg8[%c0_15, %c0_16, %c0_17], %29 {strides = array<i32>} : memref<1x16x128xf32, #tpu.memory_space<vmem>>, vector<1x16x128xf32>,
    return
  }
  func.func @transform_0(%arg0: i32, %arg1: i32) -> (i32, i32, i32) {
    %c0_i32 = arith.constant 0 : i32
    %c0_i32_0 = arith.constant 0 : i32
    return %arg0, %arg1, %c0_i32 : i32, i32, i32
  }
  func.func @transform_1(%arg0: i32, %arg1: i32) -> (i32, i32, i32) {
    %c1_i32 = arith.constant 1 : i32
    %0 = arith.addi %arg1, %c1_i32 : i32
    %c2_i32 = arith.constant 2 : i32
    %1 = arith.muli %0, %c2_i32 : i32
    %c0_i32 = arith.constant 0 : i32
    %c0_i32_0 = arith.constant 0 : i32
    return %arg0, %1, %c0_i32 : i32, i32, i32
  }
  func.func @transform_2(%arg0: i32, %arg1: i32) -> (i32, i32) {
    %c0_i32 = arith.constant 0 : i32
    %c0_i32_0 = arith.constant 0 : i32
    %c0_i32_1 = arith.constant 0 : i32
    return %c0_i32, %c0_i32_0 : i32, i32
  }
  func.func @transform_3(%arg0: i32, %arg1: i32) -> (i32, i32) {
    %c0_i32 = arith.constant 0 : i32
    %c0_i32_0 = arith.constant 0 : i32
    %c0_i32_1 = arith.constant 0 : i32
    return %c0_i32, %c0_i32_0 : i32, i32
  }
  func.func @transform_4(%arg0: i32, %arg1: i32) -> (i32, i32) {
    %c0_i32 = arith.constant 0 : i32
    %c0_i32_0 = arith.constant 0 : i32
    %c0_i32_1 = arith.constant 0 : i32
    return %c0_i32, %c0_i32_0 : i32, i32
  }
  func.func @transform_5(%arg0: i32, %arg1: i32) -> (i32, i32) {
    %c0_i32 = arith.constant 0 : i32
    %c0_i32_0 = arith.constant 0 : i32
    %c0_i32_1 = arith.constant 0 : i32
    return %c0_i32, %c0_i32_0 : i32, i32
  }
  func.func @transform_6(%arg0: i32, %arg1: i32) -> (i32, i32, i32) {
    %c0_i32 = arith.constant 0 : i32
    %c0_i32_0 = arith.constant 0 : i32
    return %arg0, %arg1, %c0_i32 : i32, i32, i32
  }
}

</mosaic_0001>

<llo_original>
// kernel: tpu_custom_call.1
$region0: #{tpu_custom_call.1}
  #allocation0 [shape = 'u32[]', space=smem, size = 0x4, offset = 0x4, fixed_abs, tag = 'smem constant byte address 0x4 - core index']
  #allocation1 [shape = 'u32[144,128]{1,0:T(1,128)}', space=vmem, size = 0x12000, scoped, tag = 'internal scratch']
  %s0 = inlined_call_operand.hbm [shape: f32[2,24,128], index: 0, kind: input, shape index: {}]
  %s1 = inlined_call_operand.hbm [shape: f32[2,24,128], index: 1, kind: input, shape index: {}]
  %s2 = inlined_call_operand.vmem [shape: f32[3,128], index: 2, kind: input, shape index: {}]
  %s3 = inlined_call_operand.vmem [shape: f32[1,128], index: 3, kind: input, shape index: {}]
  %s4 = inlined_call_operand.hbm [shape: f32[128,128], index: 4, kind: input, shape index: {}]
  %s5 = inlined_call_operand.vmem [shape: f32[1,128], index: 5, kind: input, shape index: {}]
  %s6 = inlined_call_operand.hbm [shape: f32[2,16,128], index: 6, kind: output, shape index: {}]
  %s7 = sld [smem:[#allocation0]]
  $region69: #{tpu_custom_call.1} parent=0
    _
  %s9 = ssub.s32 1, %s7
  %s10 = scalar_select 0, %s9, %s7
  $region1: #{tpu_custom_call.1} parent=0
    #allocation2 [shape = 'u8[16384]{0}', space=vmem, size = 0x4000, scoped, tag = 'input window, operand 0']
    #allocation3 [shape = 's32[2]{0}', space=sflag, size = 0x8, scoped, tag = 'scoped memory for tpu_custom_call.1']
    #allocation4 [shape = 's32[2]{0}', space=sflag, size = 0x8, scoped, tag = 'scoped memory for tpu_custom_call.1']
    #allocation5 [shape = 'u8[8192]{0}', space=vmem, size = 0x2000, scoped, tag = 'input window, operand 1']
    #allocation6 [shape = 's32[2]{0}', space=sflag, size = 0x8, scoped, tag = 'scoped memory for tpu_custom_call.1']
    #allocation7 [shape = 'u8[65536]{0}', space=vmem, size = 0x10000, scoped, tag = 'input window, operand 4, single buffered']
    #allocation8 [shape = 'u8[16384]{0}', space=vmem, size = 0x4000, scoped, tag = 'output window, operand 0']
    %11 = vsyncpa [#allocation3], 0
    %s12 = scalar_lea.sflag [#allocation3], 1
    %13 = vsyncpa %s12, 0
    %14 = vsyncpa [#allocation6], 0
    %s15 = scalar_lea.sflag [#allocation6], 1
    %16 = vsyncpa %s15, 0
    %17 = vsyncpa [#allocation4], 0
    %s18 = scalar_lea.sflag [#allocation4], 1
    %19 = vsyncpa %s18, 0
    loop: start=0, step=1, limit=4
    $region2: #{tpu_custom_call.1} parent=1 // loop_pre_header
      _
    $region3: #{tpu_custom_call.1} parent=1 // loop_header
      %s21 = sphi 0, %s25
      %p22 = scmp.ge.s32.totalorder %s21, 4
      %s28 = sphi 0, %s40
      %s29 = sphi 0, %s36
      %s30 = sphi 0, %s28
      %s31 = sphi 0, %s29
      %s32 = sphi 0, %s30
      %s33 = sphi 0, %s31
      %s45 = sphi 0, %s47
      %s48 = sphi 0, %s45
      %s49 = sphi 0, %s48
      %s65 = sphi 0, %s49
      %s77 = sphi 0, %s79
      %s80 = sphi 0, %s77
      %s81 = sphi 0, %s80
      %s97 = sphi 0, %s81
      %s101 = sphi 0, %s101
      %s103 = sphi 0, %s101
      %s104 = sphi 0, %s103
      %s118 = sphi 0, %s104
      %s122 = sphi 0, %s122
      %s124 = sphi 0, %s122
      %s125 = sphi 0, %s124
      %s139 = sphi 0, %s125
      %s143 = sphi 0, %s143
      %s145 = sphi 0, %s143
      %s146 = sphi 0, %s145
      %s160 = sphi 0, %s146
      %s164 = sphi 0, %s164
      %s166 = sphi 0, %s164
      %s167 = sphi 0, %s166
      %s181 = sphi 0, %s167
      %s189 = sphi 0, %s191
      %s192 = sphi 0, %s189
      %s193 = sphi 0, %s192
      %s209 = sphi 0, %s193
    $region4: #{tpu_custom_call.1} parent=1 // loop_header_branch
      %24 = sbr.rel (%p22) target = $region8
    $region5: #{tpu_custom_call.1} parent=1 // loop_body
      %s26 = ssub.s32 %s21, 1
      %s27 = ssub.s32 %s21, 2
      %s34 = sadd.s32 1, %s29
      %p35 = scmp.ge.s32.totalorder %s34, 1
      %s36 = scalar_select %p35, 0, %s34
      %s37 = sadd.s32 1, %s28
      %s38 = scalar_select %p35, %s37, %s28
      %p39 = scmp.ge.s32.totalorder %s38, 2
      %s40 = scalar_select %p39, 0, %s38
      %s41 = ssub.s32 %s28, %s40
      %s42 = ssub.s32 %s29, %s36
      %s43 = sor.u32 %s41, %s42
      %p44 = scmp.eq.s32.totalorder %s43, 0
      %s46 = sadd.s32 %s45, 1
      %s47 = scalar_select %p44, %s45, %s46
      %p50 = pneg %p44
      %p51 = scmp.eq.s32.totalorder %s21, 1
      %p52 = por %p50, %p51
      %p53 = scmp.ne.s32.totalorder %s45, %s48
      %p54 = scmp.eq.s32.totalorder %s21, 0
      %p55 = por %p53, %p54
      %p56 = scmp.ne.s32.totalorder %s45, %s48
      %p57 = scmp.eq.s32.totalorder %s26, 1
      %p58 = por %p56, %p57
      %p59 = scmp.ne.s32.totalorder %s48, %s49
      %p60 = scmp.eq.s32.totalorder %s26, 0
      %p61 = por %p59, %p60
      %p62 = scmp.ne.s32.totalorder %s48, %s49
      %p63 = scmp.eq.s32.totalorder %s27, 1
      %p64 = por %p62, %p63
      %p66 = scmp.ne.s32.totalorder %s49, %s65
      %p67 = scmp.eq.s32.totalorder %s27, 0
      %p68 = por %p66, %p67
      %s69 = sadd.s32 %s29, 1
      %s70 = smul.u32 %s69, 2
      %s71 = sadd.s32 %s36, 1
      %s72 = smul.u32 %s71, 2
      %s73 = ssub.s32 %s28, %s40
      %s74 = ssub.s32 %s70, %s72
      %s75 = sor.u32 %s73, %s74
      %p76 = scmp.eq.s32.totalorder %s75, 0
      %s78 = sadd.s32 %s77, 1
      %s79 = scalar_select %p76, %s77, %s78
      %p82 = pneg %p76
      %p83 = scmp.eq.s32.totalorder %s21, 1
      %p84 = por %p82, %p83
      %p85 = scmp.ne.s32.totalorder %s77, %s80
      %p86 = scmp.eq.s32.totalorder %s21, 0
      %p87 = por %p85, %p86
      %p88 = scmp.ne.s32.totalorder %s77, %s80
      %p89 = scmp.eq.s32.totalorder %s26, 1
      %p90 = por %p88, %p89
      %p91 = scmp.ne.s32.totalorder %s80, %s81
      %p92 = scmp.eq.s32.totalorder %s26, 0
      %p93 = por %p91, %p92
      %p94 = scmp.ne.s32.totalorder %s80, %s81
      %p95 = scmp.eq.s32.totalorder %s27, 1
      %p96 = por %p94, %p95
      %p98 = scmp.ne.s32.totalorder %s81, %s97
      %p99 = scmp.eq.s32.totalorder %s27, 0
      %p100 = por %p98, %p99
      %s102 = sadd.s32 %s101, 1
      %p105 = scmp.eq.s32.totalorder %s21, 1
      %p106 = scmp.ne.s32.totalorder %s101, %s103
      %p107 = scmp.eq.s32.totalorder %s21, 0
      %p108 = por %p106, %p107
      %p109 = scmp.ne.s32.totalorder %s101, %s103
      %p110 = scmp.eq.s32.totalorder %s26, 1
      %p111 = por %p109, %p110
      %p112 = scmp.ne.s32.totalorder %s103, %s104
      %p113 = scmp.eq.s32.totalorder %s26, 0
      %p114 = por %p112, %p113
      %p115 = scmp.ne.s32.totalorder %s103, %s104
      %p116 = scmp.eq.s32.totalorder %s27, 1
      %p117 = por %p115, %p116
      %p119 = scmp.ne.s32.totalorder %s104, %s118
      %p120 = scmp.eq.s32.totalorder %s27, 0
      %p121 = por %p119, %p120
      %s123 = sadd.s32 %s122, 1
      %p126 = scmp.eq.s32.totalorder %s21, 1
      %p127 = scmp.ne.s32.totalorder %s122, %s124
      %p128 = scmp.eq.s32.totalorder %s21, 0
      %p129 = por %p127, %p128
      %p130 = scmp.ne.s32.totalorder %s122, %s124
      %p131 = scmp.eq.s32.totalorder %s26, 1
      %p132 = por %p130, %p131
      %p133 = scmp.ne.s32.totalorder %s124, %s125
      %p134 = scmp.eq.s32.totalorder %s26, 0
      %p135 = por %p133, %p134
      %p136 = scmp.ne.s32.totalorder %s124, %s125
      %p137 = scmp.eq.s32.totalorder %s27, 1
      %p138 = por %p136, %p137
      %p140 = scmp.ne.s32.totalorder %s125, %s139
      %p141 = scmp.eq.s32.totalorder %s27, 0
      %p142 = por %p140, %p141
      %s144 = sadd.s32 %s143, 1
      %p147 = scmp.eq.s32.totalorder %s21, 1
      %p148 = scmp.ne.s32.totalorder %s143, %s145
      %p149 = scmp.eq.s32.totalorder %s21, 0
      %p150 = por %p148, %p149
      %p151 = scmp.ne.s32.totalorder %s143, %s145
      %p152 = scmp.eq.s32.totalorder %s26, 1
      %p153 = por %p151, %p152
      %p154 = scmp.ne.s32.totalorder %s145, %s146
      %p155 = scmp.eq.s32.totalorder %s26, 0
      %p156 = por %p154, %p155
      %p157 = scmp.ne.s32.totalorder %s145, %s146
      %p158 = scmp.eq.s32.totalorder %s27, 1
      %p159 = por %p157, %p158
      %p161 = scmp.ne.s32.totalorder %s146, %s160
      %p162 = scmp.eq.s32.totalorder %s27, 0
      %p163 = por %p161, %p162
      %s165 = sadd.s32 %s164, 1
      %p168 = scmp.eq.s32.totalorder %s21, 1
      %p169 = scmp.ne.s32.totalorder %s164, %s166
      %p170 = scmp.eq.s32.totalorder %s21, 0
      %p171 = por %p169, %p170
      %p172 = scmp.ne.s32.totalorder %s164, %s166
      %p173 = scmp.eq.s32.totalorder %s26, 1
      %p174 = por %p172, %p173
      %p175 = scmp.ne.s32.totalorder %s166, %s167
      %p176 = scmp.eq.s32.totalorder %s26, 0
      %p177 = por %p175, %p176
      %p178 = scmp.ne.s32.totalorder %s166, %s167
      %p179 = scmp.eq.s32.totalorder %s27, 1
      %p180 = por %p178, %p179
      %p182 = scmp.ne.s32.totalorder %s167, %s181
      %p183 = scmp.eq.s32.totalorder %s27, 0
      %p184 = por %p182, %p183
      %s185 = ssub.s32 %s28, %s40
      %s186 = ssub.s32 %s29, %s36
      %s187 = sor.u32 %s185, %s186
      %p188 = scmp.eq.s32.totalorder %s187, 0
      %s190 = sadd.s32 %s189, 1
      %s191 = scalar_select %p188, %s189, %s190
      %p194 = pneg %p188
      %p195 = scmp.eq.s32.totalorder %s21, 1
      %p196 = por %p194, %p195
      %p197 = scmp.ne.s32.totalorder %s189, %s192
      %p198 = scmp.eq.s32.totalorder %s21, 0
      %p199 = por %p197, %p198
      %p200 = scmp.ne.s32.totalorder %s189, %s192
      %p201 = scmp.eq.s32.totalorder %s26, 1
      %p202 = por %p200, %p201
      %p203 = scmp.ne.s32.totalorder %s192, %s193
      %p204 = scmp.eq.s32.totalorder %s26, 0
      %p205 = por %p203, %p204
      %p206 = scmp.ne.s32.totalorder %s192, %s193
      %p207 = scmp.eq.s32.totalorder %s27, 1
      %p208 = por %p206, %p207
      %p210 = scmp.ne.s32.totalorder %s193, %s209
      %p211 = scmp.eq.s32.totalorder %s27, 0
      %p212 = por %p210, %p211
      %p213 = scmp.le.s32.totalorder 1, %s21
      %p214 = scmp.lt.s32.totalorder %s21, 3
      %p215 = pnand %p213, %p214
      %p216 = pneg %p215
      // Predicated region
      $region9: #{tpu_custom_call.1} parent=5 // pred_check
        _
      $region10: #{tpu_custom_call.1} parent=5 // pred_check_branch
        %218 = sbr.rel (%p215) target = $region12
      $region11: #{tpu_custom_call.1} parent=5 // pred_region
        %s219 = ssub.s32 %s21, 1
        // Predicated region
        $region13: #{tpu_custom_call.1} parent=11 // pred_check
          %p220 = pneg %p114
        $region14: #{tpu_custom_call.1} parent=11 // pred_check_branch
          %222 = sbr.rel (%p220) target = $region16
        $region15: #{tpu_custom_call.1} parent=11 // pred_region
          _
        $region16: #{tpu_custom_call.1} parent=11 // pred_fallthru
          _
        // Predicated region
        $region17: #{tpu_custom_call.1} parent=11 // pred_check
          %p223 = pneg %p135
        $region18: #{tpu_custom_call.1} parent=11 // pred_check_branch
          %225 = sbr.rel (%p223) target = $region20
        $region19: #{tpu_custom_call.1} parent=11 // pred_region
          _
        $region20: #{tpu_custom_call.1} parent=11 // pred_fallthru
          _
        // Predicated region
        $region21: #{tpu_custom_call.1} parent=11 // pred_check
          %p226 = pneg %p156
        $region22: #{tpu_custom_call.1} parent=11 // pred_check_branch
          %228 = sbr.rel (%p226) target = $region24
        $region23: #{tpu_custom_call.1} parent=11 // pred_region
          %s230 = ssub.s32 2048, 2048
          %231 = vsyncadd [#allocation6], %s230
          %s232 = sshll.u32 [#allocation7], 4
          %s233 = int_to_ptr.vmem [resolvable:$true] %s232
          %238 = dma.hbm_to_vmem [thread:$0]  %s4, 2048, %s233, [#allocation6], 128, 128, 8
        $region24: #{tpu_custom_call.1} parent=11 // pred_fallthru
          _
        // Predicated region
        $region25: #{tpu_custom_call.1} parent=11 // pred_check
          %p239 = pneg %p177
        $region26: #{tpu_custom_call.1} parent=11 // pred_check_branch
          %241 = sbr.rel (%p239) target = $region28
        $region27: #{tpu_custom_call.1} parent=11 // pred_region
          _
        $region28: #{tpu_custom_call.1} parent=11 // pred_fallthru
          _
      $region12: #{tpu_custom_call.1} parent=5 // pred_fallthru
        _
      %p242 = scmp.lt.s32.totalorder %s21, 2
      // Predicated region
      $region29: #{tpu_custom_call.1} parent=5 // pred_check
        %p243 = pneg %p242
      $region30: #{tpu_custom_call.1} parent=5 // pred_check_branch
        %245 = sbr.rel (%p243) target = $region32
      $region31: #{tpu_custom_call.1} parent=5 // pred_region
        // Predicated region
        $region33: #{tpu_custom_call.1} parent=31 // pred_check
          %p246 = pneg %p55
        $region34: #{tpu_custom_call.1} parent=31 // pred_check_branch
          %248 = sbr.rel (%p246) target = $region36
        $region35: #{tpu_custom_call.1} parent=31 // pred_region
          %s249 = sand.u32 %s45, 1
          %s250 = scalar_lea.sflag [#allocation3], %s249
          %s251 = sand.u32 %s45, 1
          %s252 = smul.addr %s251, 16
          %s253 = scalar_lea.vmem [#allocation2], %s252
          %s254 = smul.u32 2, %s29
          %s255 = ssub.s32 3, %s254
          %p256 = scmp.lt.s32.totalorder %s255, 2
          %s257 = scalar_select %p256, %s255, 2
          %s258 = smul.u32 128, %s257
          %s260 = ssub.s32 256, %s258
          %261 = vsyncadd %s250, %s260
          %p262 = scmp.ne.s32.totalorder 0, %s258
          %s263 = smul.addr %s28, 3
          %s264 = sadd.s32 %s254, %s263
          %s265 = smul.addr %s264, 128
          %s266 = scalar_lea.hbm %s0, %s265
          %s267 = smul.u32 8, %s257
          %s268 = sshll.u32 %s253, 4
          %s269 = int_to_ptr.vmem [resolvable:$true] %s268
          %s270 = sshll.u32 %s267, 4
          %274 = dma.hbm_to_vmem [thread:$0]  (%p262), %s266, %s270, %s269, %s250, 128, 128, 8
        $region36: #{tpu_custom_call.1} parent=31 // pred_fallthru
          _
        // Predicated region
        $region37: #{tpu_custom_call.1} parent=31 // pred_check
          %p275 = pneg %p87
        $region38: #{tpu_custom_call.1} parent=31 // pred_check_branch
          %277 = sbr.rel (%p275) target = $region40
        $region39: #{tpu_custom_call.1} parent=31 // pred_region
          %s278 = sand.u32 %s21, 1
          %s279 = scalar_lea.sflag [#allocation6], %s278
          %s280 = sand.u32 %s77, 1
          %s281 = smul.addr %s280, 8
          %s282 = scalar_lea.vmem [#allocation5], %s281
          %s283 = sadd.s32 %s29, 1
          %s284 = smul.u32 %s283, 2
          %s286 = ssub.s32 128, 128
          %287 = vsyncadd %s279, %s286
          %s288 = smul.addr %s28, 3
          %s289 = sadd.s32 %s284, %s288
          %s290 = smul.addr %s289, 128
          %s291 = scalar_lea.hbm %s1, %s290
          %s293 = sshll.u32 %s282, 4
          %s294 = int_to_ptr.vmem [resolvable:$true] %s293
          %296 = dma.hbm_to_vmem [thread:$0]  %s291, 128, %s294, %s279
        $region40: #{tpu_custom_call.1} parent=31 // pred_fallthru
          _
      $region32: #{tpu_custom_call.1} parent=5 // pred_fallthru
        _
      %p297 = scmp.le.s32.totalorder 1, %s21
      %p298 = scmp.lt.s32.totalorder %s21, 3
      %p299 = pnand %p297, %p298
      %p300 = pneg %p299
      // Predicated region
      $region41: #{tpu_custom_call.1} parent=5 // pred_check
        _
      $region42: #{tpu_custom_call.1} parent=5 // pred_check_branch
        %302 = sbr.rel (%p299) target = $region44
      $region43: #{tpu_custom_call.1} parent=5 // pred_region
        %s303 = ssub.s32 %s21, 1
        %s304 = sand.u32 %s48, 1
        %s305 = scalar_lea.sflag [#allocation3], %s304
        %s306 = sand.u32 %s48, 1
        %s307 = smul.addr %s306, 16
        %s308 = scalar_lea.vmem [#allocation2], %s307
        // Predicated region
        $region45: #{tpu_custom_call.1} parent=43 // pred_check
          %p309 = pneg %p61
        $region46: #{tpu_custom_call.1} parent=43 // pred_check_branch
          %311 = sbr.rel (%p309) target = $region48
        $region47: #{tpu_custom_call.1} parent=43 // pred_region
          %312 = dma.done %s305, 256
        $region48: #{tpu_custom_call.1} parent=43 // pred_fallthru
          _
        %s313 = sand.u32 %s26, 1
        %s314 = scalar_lea.sflag [#allocation6], %s313
        %s315 = sand.u32 %s80, 1
        %s316 = smul.addr %s315, 8
        %s317 = scalar_lea.vmem [#allocation5], %s316
        // Predicated region
        $region49: #{tpu_custom_call.1} parent=43 // pred_check
          %p318 = pneg %p93
        $region50: #{tpu_custom_call.1} parent=43 // pred_check_branch
          %320 = sbr.rel (%p318) target = $region52
        $region51: #{tpu_custom_call.1} parent=43 // pred_region
          %321 = dma.done %s314, 128
        $region52: #{tpu_custom_call.1} parent=43 // pred_fallthru
          _
        // Predicated region
        $region53: #{tpu_custom_call.1} parent=43 // pred_check
          %p322 = pneg %p156
        $region54: #{tpu_custom_call.1} parent=43 // pred_check_branch
          %324 = sbr.rel (%p322) target = $region56
        $region55: #{tpu_custom_call.1} parent=43 // pred_region
          %325 = dma.done [#allocation6], 2048
        $region56: #{tpu_custom_call.1} parent=43 // pred_fallthru
          _
        %s326 = sand.u32 %s48, 1
        %s327 = scalar_lea.sflag [#allocation3], %s326
        %s328 = sand.u32 %s48, 1
        %s329 = smul.addr %s328, 16
        %s330 = scalar_lea.vmem [#allocation2], %s329
        %p331 = pneg %p61
        %p332 = pneg %p58
        %s333 = sand.u32 %s26, 1
        %s334 = scalar_lea.sflag [#allocation6], %s333
        %s335 = sand.u32 %s80, 1
        %s336 = smul.addr %s335, 8
        %s337 = scalar_lea.vmem [#allocation5], %s336
        %p338 = pneg %p93
        %p339 = pneg %p90
        %p340 = pneg %p114
        %p341 = pneg %p111
        %p342 = pneg %p135
        %p343 = pneg %p132
        %p344 = pneg %p156
        %p345 = pneg %p153
        %p346 = pneg %p177
        %p347 = pneg %p174
        %p348 = pneg %p205
        %p349 = pneg %p202
        %s350 = sand.u32 %s192, 1
        %s351 = scalar_lea.sflag [#allocation4], %s350
        %s352 = sand.u32 %s192, 1
        %s353 = smul.addr %s352, 16
        %s354 = scalar_lea.vmem [#allocation8], %s353
        %s355 = smul.u32 2, %s31
        %s356 = ssub.s32 3, %s355
        %p357 = scmp.lt.s32.totalorder %s356, 2
        %s358 = scalar_select %p357, %s356, 2
        %s359 = smul.u32 128, %s358
        %s360 = sadd.s32 %s31, 1
        %s361 = smul.u32 %s360, 2
        %s362 = smul.u32 2, %s31
        %v363 = vld [vmem:[%s308] sm:$0xff]
        %v364 = vld [vmem:[%s308 + $0x8] sm:$0xff]
        %v365 = vld [vmem:[%s317] sm:$0xff]
        %v366 = vld [vmem:[%s2] sm:$0x1]
        %v367 = vlaneseq
        %v368 = vshrl.u32 %v367, 7
        %v369 = vsub.s32 0, %v368
        %v370 = vrot.slane %v366, %v369
        %v371 = vmul.f32 %v363, %v370
        %v372 = vmul.f32 %v364, %v370
        %v373 = vld [vmem:[%s2 + $0x1] sm:$0x1]
        %v374 = vlaneseq
        %v375 = vshrl.u32 %v374, 7
        %v376 = vsub.s32 0, %v375
        %v377 = vrot.slane %v373, %v376
        %v378 = vmul.f32 %v363, %v377
        %v379 = vmul.f32 %v364, %v377
        %v380 = vmul.f32 %v365, %v377
        %vm384 = vcmask 1046528
        %v385 = vrot.slane %v378, 1
        %v386 = vrot.slane %v379, 1
        %v387 = vsel %vm384, %v385, %v386
        %v388 = vrot.slane %v380, 1
        %v389 = vsel %vm384, %v386, %v388
        %v392 = vadd.f32 %v371, %v387
        %v393 = vadd.f32 %v372, %v389
        %v394 = vld [vmem:[%s2 + $0x2] sm:$0x1]
        %v395 = vlaneseq
        %v396 = vshrl.u32 %v395, 7
        %v397 = vsub.s32 0, %v396
        %v398 = vrot.slane %v394, %v397
        %v399 = vmul.f32 %v363, %v398
        %v400 = vmul.f32 %v364, %v398
        %v401 = vmul.f32 %v365, %v398
        %vm405 = vcmask 1045504
        %v406 = vrot.slane %v399, 2
        %v407 = vrot.slane %v400, 2
        %v408 = vsel %vm405, %v406, %v407
        %v409 = vrot.slane %v401, 2
        %v410 = vsel %vm405, %v407, %v409
        %v413 = vadd.f32 %v392, %v408
        %v414 = vadd.f32 %v393, %v410
        %v415 = vld [vmem:[%s3] sm:$0x1]
        %v417 = vlaneseq
        %v418 = vshrl.u32 %v417, 7
        %v419 = vsub.s32 0, %v418
        %v420 = vrot.slane %v415, %v419
        %v422 = vadd.f32 %v413, %v420
        %v423 = vadd.f32 %v414, %v420
        %v424 = vld [vmem:[#allocation7] sm:$0xff]
        %v425 = vld [vmem:[#allocation7 + $0x8] sm:$0xff]
        %v426 = vld [vmem:[#allocation7 + $0x10] sm:$0xff]
        %v427 = vld [vmem:[#allocation7 + $0x18] sm:$0xff]
        %v428 = vld [vmem:[#allocation7 + $0x20] sm:$0xff]
        %v429 = vld [vmem:[#allocation7 + $0x28] sm:$0xff]
        %v430 = vld [vmem:[#allocation7 + $0x30] sm:$0xff]
        %v431 = vld [vmem:[#allocation7 + $0x38] sm:$0xff]
        %v432 = vld [vmem:[#allocation7 + $0x40] sm:$0xff]
        %v433 = vld [vmem:[#allocation7 + $0x48] sm:$0xff]
        %v434 = vld [vmem:[#allocation7 + $0x50] sm:$0xff]
        %v435 = vld [vmem:[#allocation7 + $0x58] sm:$0xff]
        %v436 = vld [vmem:[#allocation7 + $0x60] sm:$0xff]
        %v437 = vld [vmem:[#allocation7 + $0x68] sm:$0xff]
        %v438 = vld [vmem:[#allocation7 + $0x70] sm:$0xff]
        %v439 = vld [vmem:[#allocation7 + $0x78] sm:$0xff]
        %v440 = vld [vmem:[%s5] sm:$0x1]
        %v442 = vlaneseq
        %v443 = vshrl.u32 %v442, 7
        %v444 = vsub.s32 0, %v443
        %v445 = vrot.slane %v440, %v444
        %447 = vmatprep.subr.mxu0 0.0
        %448 = vmatpush1.msra.mxu0 %v424
        %449 = vmatprep.subr.mxu0 0.0
        %450 = vmatpush1.msra.mxu0 %v425
        %451 = vmatprep.subr.mxu0 0.0
        %452 = vmatpush1.msra.mxu0 %v426
        %453 = vmatprep.subr.mxu0 0.0
        %454 = vmatpush1.msra.mxu0 %v427
        %455 = vmatprep.subr.mxu0 0.0
        %456 = vmatpush1.msra.mxu0 %v428
        %457 = vmatprep.subr.mxu0 0.0
        %458 = vmatpush1.msra.mxu0 %v429
        %459 = vmatprep.subr.mxu0 0.0
        %460 = vmatpush1.msra.mxu0 %v430
        %461 = vmatprep.subr.mxu0 0.0
        %462 = vmatpush1.msra.mxu0 %v431
        %463 = vmatprep.subr.mxu0 0.0
        %464 = vmatpush1.msra.mxu0 %v432
        %465 = vmatprep.subr.mxu0 0.0
        %466 = vmatpush1.msra.mxu0 %v433
        %467 = vmatprep.subr.mxu0 0.0
        %468 = vmatpush1.msra.mxu0 %v434
        %469 = vmatprep.subr.mxu0 0.0
        %470 = vmatpush1.msra.mxu0 %v435
        %471 = vmatprep.subr.mxu0 0.0
        %472 = vmatpush1.msra.mxu0 %v436
        %473 = vmatprep.subr.mxu0 0.0
        %474 = vmatpush1.msra.mxu0 %v437
        %475 = vmatprep.subr.mxu0 0.0
        %476 = vmatpush1.msra.mxu0 %v438
        %477 = vmatprep.subr.mxu0 0.0
        %478 = vmatpush1.msra.mxu0 %v439
        %479 = vmatprep.subr.mxu0 0.0
        %480 = vmatpush1.msra.mxu0 0.0
        %481 = vmatprep.subr.mxu0 0.0
        %482 = vmatpush1.msra.mxu0 0.0
        %483 = vmatprep.subr.mxu0 0.0
        %484 = vmatpush1.msra.mxu0 0.0
        %485 = vmatprep.subr.mxu0 0.0
        %486 = vmatpush1.msra.mxu0 0.0
        %487 = vmatprep.subr.mxu0 0.0
        %488 = vmatpush1.msra.mxu0 0.0
        %489 = vmatprep.subr.mxu0 0.0
        %490 = vmatpush1.msra.mxu0 0.0
        %491 = vmatprep.subr.mxu0 0.0
        %492 = vmatpush1.msra.mxu0 0.0
        %493 = vmatprep.subr.mxu0 0.0
        %494 = vmatpush1.msra.mxu0 0.0
        %495 = vmatprep.subr.mxu0 0.0
        %496 = vmatpush1.msra.mxu0 0.0
        %497 = vmatprep.subr.mxu0 0.0
        %498 = vmatpush1.msra.mxu0 0.0
        %499 = vmatprep.subr.mxu0 0.0
        %500 = vmatpush1.msra.mxu0 0.0
        %501 = vmatprep.subr.mxu0 0.0
        %502 = vmatpush1.msra.mxu0 0.0
        %503 = vmatprep.subr.mxu0 0.0
        %504 = vmatpush1.msra.mxu0 0.0
        %505 = vmatprep.subr.mxu0 0.0
        %506 = vmatpush1.msra.mxu0 0.0
        %507 = vmatprep.subr.mxu0 0.0
        %508 = vmatpush1.msra.mxu0 0.0
        %509 = vmatprep.subr.mxu0 0.0
        %510 = vmatpush1.msra.mxu0 0.0
        %511 = vmatprep.mubr.f32.mxu0 0.0
        %512 = vmatmul.mubr.f32.gmra.mrb[0].mxu0 %v422
        %v513 = vpop.f32.mrb[0].mxu0
        %v514 = vadd.f32 %v445, %v513
        %v515 = vpop.f32.mrb[0].mxu0
        %516 = vmatprep.mubr.f32.mxu0 0.0
        %517 = vmatmul.mubr.f32.gmra.mrb[0].mxu0 %v423
        %v518 = vpop.f32.mrb[0].mxu0
        %v519 = vadd.f32 %v445, %v518
        %v520 = vpop.f32.mrb[0].mxu0
        %521 = vdwg.mxu0
        %522 = vst [vmem:[%s354] sm:$0xff] %v514
        %523 = vst [vmem:[%s354 + $0x8] sm:$0xff] %v519
        %s524 = sand.u32 %s192, 1
        %s525 = scalar_lea.sflag [#allocation4], %s524
        %s526 = sand.u32 %s192, 1
        %s527 = smul.addr %s526, 16
        %s528 = scalar_lea.vmem [#allocation8], %s527
        // Predicated region
        $region57: #{tpu_custom_call.1} parent=43 // pred_check
          %p529 = pneg %p202
        $region58: #{tpu_custom_call.1} parent=43 // pred_check_branch
          %531 = sbr.rel (%p529) target = $region60
        $region59: #{tpu_custom_call.1} parent=43 // pred_region
          %s532 = smul.u32 2, %s31
          %s534 = ssub.s32 256, 256
          %535 = vsyncadd %s525, %s534
          %s536 = smul.addr %s30, 2
          %s537 = sadd.s32 %s532, %s536
          %s538 = smul.addr %s537, 128
          %s539 = scalar_lea.hbm %s6, %s538
          %s540 = sshll.u32 %s528, 4
          %s541 = int_to_ptr.vmem [resolvable:$true] %s540
          %546 = dma.vmem_to_hbm [thread:$0]  %s541, 256, %s539, %s525, 128, 128, 8
        $region60: #{tpu_custom_call.1} parent=43 // pred_fallthru
          _
      $region44: #{tpu_custom_call.1} parent=5 // pred_fallthru
        _
      %p547 = scmp.le.s32.totalorder 2, %s21
      // Predicated region
      $region61: #{tpu_custom_call.1} parent=5 // pred_check
        %p548 = pneg %p547
      $region62: #{tpu_custom_call.1} parent=5 // pred_check_branch
        %550 = sbr.rel (%p548) target = $region64
      $region63: #{tpu_custom_call.1} parent=5 // pred_region
        %s551 = ssub.s32 %s21, 2
        // Predicated region
        $region65: #{tpu_custom_call.1} parent=63 // pred_check
          %p552 = pneg %p208
        $region66: #{tpu_custom_call.1} parent=63 // pred_check_branch
          %554 = sbr.rel (%p552) target = $region68
        $region67: #{tpu_custom_call.1} parent=63 // pred_region
          %s555 = sand.u32 %s193, 1
          %s556 = scalar_lea.sflag [#allocation4], %s555
          %s557 = sand.u32 %s193, 1
          %s558 = smul.addr %s557, 16
          %s559 = scalar_lea.vmem [#allocation8], %s558
          %560 = dma.done %s556, 256
        $region68: #{tpu_custom_call.1} parent=63 // pred_fallthru
          _
      $region64: #{tpu_custom_call.1} parent=5 // pred_fallthru
        _
    $region6: #{tpu_custom_call.1} parent=1 // loop_footer
      %s25 = sadd.s32 1, %s21
    $region7: #{tpu_custom_call.1} parent=1 // loop_footer_branch
      %20 = sbr.rel target = $region3
    $region8: #{tpu_custom_call.1} parent=1 // loop_exit
      _
    %561 = vsyncpa [#allocation3], 1
    %s562 = scalar_lea.sflag [#allocation3], 1
    %563 = vsyncpa %s562, 1
    %564 = vsyncpa [#allocation6], 1
    %s565 = scalar_lea.sflag [#allocation6], 1
    %566 = vsyncpa %s565, 1
    %567 = vsyncpa [#allocation4], 1
    %s568 = scalar_lea.sflag [#allocation4], 1
    %569 = vsyncpa %s568, 1

</llo_original>
